<compile_context>
chip_gen: v7x
topology: tpu7x:2x2x1
jax: 0.10.0
libtpu: 0.0.40
codegen_flags: <defaults>
</compile_context>

<pallas_src>
import jax
import jax.numpy as jnp
from jax.experimental import pallas as pl
from jax.experimental.pallas import tpu as pltpu


def flatten_1d(x):
    """FlattenLayer_1d.forward: (B, ...) -> (B, prod(...)).

    Zero-cost path (recommended): a row-major reshape of a contiguous buffer
    is metadata-only — no kernel launch, no HBM traffic.
    """
    return jnp.reshape(x, (x.shape[0], -1))


def _flatten_copy_kernel(x_hbm, o_hbm, sem):
    # Single whole-buffer HBM->HBM DMA (both refs left in place via pl.ANY).
    # No VMEM staging, no grid, no pipeline overhead.
    cp = pltpu.make_async_copy(x_hbm, o_hbm, sem)
    cp.start()
    cp.wait()


def flatten_1d_pallas(x):
    """Pallas variant: materializes the flattened view with one HBM->HBM DMA.

    Only useful when a fresh output buffer is explicitly required; otherwise
    use flatten_1d() (free) or fuse the (B, flat) view into the consumer
    kernel's BlockSpec.
    """
    B = x.shape[0]
    flat = 1
    for d in x.shape[1:]:
        flat *= d

    # Metadata-only reshape in the wrapper; element order matches torch
    # x.view(B, -1) on a contiguous tensor.  The kernel then copies identical
    # (B, flat) buffers with a single contiguous DMA descriptor.
    x2d = jnp.reshape(x, (B, flat))

    return pl.pallas_call(
        _flatten_copy_kernel,
        out_shape=jax.ShapeDtypeStruct((B, flat), x.dtype),
        in_specs=[pl.BlockSpec(memory_space=pl.ANY)],
        out_specs=pl.BlockSpec(memory_space=pl.ANY),
        scratch_shapes=[pltpu.SemaphoreType.DMA(())],
    )(x2d)


if __name__ == "__main__":
    # Small deterministic NCHW input consistent with the module.
    key = jax.random.PRNGKey(0)
    B, C, H, W = 2, 4, 16, 16
    x = jax.random.normal(key, (B, C, H, W), dtype=jnp.float32)

    # Zero-cost reference path (what production code should call).
    ref = flatten_1d(x)
    ref = jax.block_until_ready(ref)

    # Pallas DMA-copy variant, run once for validation.
    out = flatten_1d_pallas(x)
    out = jax.block_until_ready(out)

    assert out.shape == (B, C * H * W), out.shape
    assert jnp.array_equal(out, ref), "mismatch vs reference flatten"

    print("KERNEL_OK")
</pallas_src>

<mosaic_0001>
module attributes {stable_mosaic.version = 11 : i64} {
  func.func @_flatten_copy_kernel(%arg0: memref<2x1024xf32, #tpu.memory_space<any>>, %arg1: memref<2x1024xf32, #tpu.memory_space<any>>, %arg2: memref<!tpu.dma_semaphore, #tpu.memory_space<semaphore_mem>>) attributes {dimension_semantics = [], scalar_prefetch = 0 : i64, scratch_operands = 1 : i64, tpu.core_type = #tpu.core_type<tc>} {
    tpu.enqueue_dma source(%arg0 : memref<2x1024xf32, #tpu.memory_space<any>>) target(%arg1 : memref<2x1024xf32, #tpu.memory_space<any>>) target_semaphore(%arg2 : memref<!tpu.dma_semaphore, #tpu.memory_space<semaphore_mem>>)
    tpu.wait_dma2 semaphore(%arg2 : memref<!tpu.dma_semaphore, #tpu.memory_space<semaphore_mem>>) src(%arg0 : memref<2x1024xf32, #tpu.memory_space<any>>) dst(%arg1 : memref<2x1024xf32, #tpu.memory_space<any>>)
    return
  }
}

</mosaic_0001>

<llo_original>
// kernel: tpu_custom_call.1
$region0: #{tpu_custom_call.1}
  #allocation0 [shape = 'u32[]', space=smem, size = 0x4, offset = 0x4, fixed_abs, tag = 'smem constant byte address 0x4 - core index']
  #allocation1 [shape = 'u32[144,128]{1,0:T(1,128)}', space=vmem, size = 0x12000, scoped, tag = 'internal scratch']
  #allocation2 [shape = 's32[1]{0}', space=sflag, size = 0x4, scoped, tag = 'scratch operand']
  #allocation3 [shape = 's32[]', space=sflag, size = 0x4, offset = 0, fixed_abs, tag = 'sflag constant byte address 0x0 - dummy sync flag']
  #allocation4 [shape = 'u32[0]{0}', space=smem, size = 0, offset = 0, fixed_abs, tag = 'smem constant byte address 0x0 - null']
  %s0 = inlined_call_operand.hbm [shape: f32[2,1024], index: 0, kind: input, shape index: {}]
  %s1 = inlined_call_operand.hbm [shape: f32[2,1024], index: 1, kind: output, shape index: {}]
  %s2 = sld [smem:[#allocation0]]
  $region2: #{tpu_custom_call.1} parent=0
    _
  %s4 = ssub.s32 1, %s2
  %s5 = scalar_select 0, %s4, %s2
  %s7 = sshll.u32 1, 14
  %s8 = sxor.u32 4294967295, %s7
  %s11 = sshll.u32 3, 24
  %s12 = sxor.u32 4294967295, %s11
  %s13 = sand.u32 0, %s12
  %s15 = sor.u32 %s13, 0
  %18 = dma.general %s0, 256, %s1, [#allocation2], [#allocation3], [#allocation4], %s15, 0
  %s19 = smul.u32 2, 1
  %s20 = smul.u32 %s19, 8
  %s21 = sshll.u32 %s20, 4
  %22 = dma.done [#allocation2], %s21
  %23 = vsyncmov [#allocation2]
  %s24 = vpop.sfrf %23
  %p25 = scmp.eq.s32.totalorder %s24, 0
  %p26 = pneg %p25
  %28 = shalt.err (%p26)

</llo_original>
